<compile_context>
chip_gen: v5e
topology: v5e:2x2
jax: 0.10.0
libtpu: 0.0.40
codegen_flags: <defaults>
</compile_context>

<pallas_src>
import functools

import jax
import jax.numpy as jnp
from jax.experimental import pallas as pl
from jax.experimental.pallas import tpu as pltpu


def _round_up(x, m):
    return (x + m - 1) // m * m


def _fused_conv_bn_act_kernel(p_ref, w_ref, gamma_ref, beta_ref, o_ref,
                              sum_ref, sumsq_ref, *, m_true, eps, slope, tile_m):
    """Conv (one lane-dense im2col matmul per tile) + train-mode BN + LeakyReLU, fused.

    p_ref:     (tile_m, KKC_pad)   zero-padded im2col patch tile (bf16 or f32)
    w_ref:     (KKC_pad, CO_pad)   zero-padded weight matrix (constant index -> VMEM resident)
    gamma_ref, beta_ref: (1, CO_pad)  BN affine params (f32)
    o_ref:     (M_pad, CO_pad)     FULL f32 output slab, VMEM-resident across the grid;
                                   doubles as the conv-output staging buffer.
    sum_ref, sumsq_ref: (1, CO_pad) f32 VMEM scratch, accumulated across the grid.
    """
    step = pl.program_id(0)

    @pl.when(step == 0)
    def _():
        sum_ref[...] = jnp.zeros_like(sum_ref)
        sumsq_ref[...] = jnp.zeros_like(sumsq_ref)

    # One MXU matmul per tile; contraction over K*K*C_in (zero-padded to a multiple of 128).
    y = jnp.dot(p_ref[...], w_ref[...], preferred_element_type=jnp.float32)

    # Stage the conv tile into the resident output slab (f32) for the final epilogue.
    row0 = pl.multiple_of(step * tile_m, tile_m)
    o_ref[pl.ds(row0, tile_m), :] = y

    # Single-pass batch statistics (padded rows are all-zero patches -> contribute 0).
    sum_ref[...] += jnp.sum(y, axis=0, keepdims=True)
    sumsq_ref[...] += jnp.sum(y * y, axis=0, keepdims=True)

    @pl.when(step == pl.num_programs(0) - 1)
    def _():
        inv_n = 1.0 / m_true
        mean = sum_ref[...] * inv_n
        var = sumsq_ref[...] * inv_n - mean * mean        # biased variance (train-mode BN)
        scale = gamma_ref[...] * jax.lax.rsqrt(var + eps)
        shift = beta_ref[...] - mean * scale
        z = o_ref[...] * scale + shift                    # per-channel FMA over whole slab
        o_ref[...] = jnp.where(z >= 0, z, slope * z)      # LeakyReLU


def conv_bn_activation(x_nchw, weight_oikk, gamma, beta, *,
                       stride=1, eps=1e-5, leaky_slope=0.1,
                       tile_m=1024, matmul_dtype=jnp.bfloat16):
    """Forward of Conv_Bn_Activation(Cin, Cout, K, stride, 'leaky') on NCHW input."""
    N, C_in, H, W = x_nchw.shape
    C_out, C_in_w, K, K2 = weight_oikk.shape
    assert C_in_w == C_in and K == K2

    pad = (K - 1) // 2
    H_out = (H + 2 * pad - K) // stride + 1
    W_out = (W + 2 * pad - K) // stride + 1
    M = N * H_out * W_out
    KKC = K * K * C_in

    # --- Layout glue (pure data movement): NCHW -> NHWC, border pad, im2col so the conv
    # becomes one lane-dense matmul inside the kernel.  Patches/weight are emitted directly
    # in the matmul dtype (bf16 by default) which also halves their HBM footprint.
    x_nhwc = jnp.transpose(x_nchw, (0, 2, 3, 1)).astype(matmul_dtype)
    x_pad = jnp.pad(x_nhwc, ((0, 0), (pad, pad), (pad, pad), (0, 0)))

    cols = []
    for kh in range(K):
        for kw in range(K):
            cols.append(jax.lax.slice(
                x_pad,
                (0, kh, kw, 0),
                (N,
                 kh + (H_out - 1) * stride + 1,
                 kw + (W_out - 1) * stride + 1,
                 C_in),
                (1, stride, stride, 1)))                        # (N, H_out, W_out, C_in)
    patches = jnp.concatenate(cols, axis=-1).reshape(M, KKC)    # rows (n,h,w); cols (kh,kw,cin)

    # PyTorch weight (Cout, Cin, K, K) -> (K, K, Cin, Cout) -> (K*K*Cin, Cout); row ordering
    # matches the patch concatenation above.
    w2d = jnp.transpose(weight_oikk, (2, 3, 1, 0)).reshape(KKC, C_out).astype(matmul_dtype)

    # Lane-dense zero padding (true zeros, so conv result and statistics are unchanged).
    KKC_pad = _round_up(KKC, 128)
    CO_pad = _round_up(C_out, 128)
    tile_m = _round_up(max(8, min(tile_m, _round_up(M, 8))), 8)
    M_pad = _round_up(M, tile_m)
    n_tiles = M_pad // tile_m

    patches_p = jnp.pad(patches, ((0, M_pad - M), (0, KKC_pad - KKC)))
    w_p = jnp.pad(w2d, ((0, KKC_pad - KKC), (0, CO_pad - C_out)))
    gamma_p = jnp.pad(gamma.astype(jnp.float32).reshape(1, C_out),
                      ((0, 0), (0, CO_pad - C_out)))
    beta_p = jnp.pad(beta.astype(jnp.float32).reshape(1, C_out),
                     ((0, 0), (0, CO_pad - C_out)))

    # The whole conv-output slab stays VMEM-resident across the grid (no HBM round trip).
    slab_bytes = M_pad * CO_pad * 4
    if slab_bytes > 8 * 1024 * 1024:
        raise NotImplementedError(
            "conv output slab too large to keep VMEM-resident; see TODO(synk) at file top")

    mm_itemsize = jnp.dtype(matmul_dtype).itemsize
    est_vmem = (2 * tile_m * KKC_pad * mm_itemsize        # patch tiles (double-buffered)
                + 2 * KKC_pad * CO_pad * mm_itemsize      # weight (conservatively x2)
                + 2 * slab_bytes                          # resident output (conservatively x2)
                + 8 * CO_pad * 4)                         # gamma/beta/sum/sumsq
    vmem_limit = int(min(64 * 1024 * 1024, max(32 * 1024 * 1024, 2 * est_vmem)))

    out_slab = pl.pallas_call(
        functools.partial(_fused_conv_bn_act_kernel, m_true=float(M), eps=eps,
                          slope=leaky_slope, tile_m=tile_m),
        out_shape=jax.ShapeDtypeStruct((M_pad, CO_pad), jnp.float32),
        grid_spec=pltpu.PrefetchScalarGridSpec(
            num_scalar_prefetch=0,
            grid=(n_tiles,),
            in_specs=[
                pl.BlockSpec((tile_m, KKC_pad), lambda i: (i, 0)),
                pl.BlockSpec((KKC_pad, CO_pad), lambda i: (0, 0)),   # weight stays resident
                pl.BlockSpec((1, CO_pad), lambda i: (0, 0)),
                pl.BlockSpec((1, CO_pad), lambda i: (0, 0)),
            ],
            out_specs=pl.BlockSpec((M_pad, CO_pad), lambda i: (0, 0)),  # resident full slab
            scratch_shapes=[
                pltpu.VMEM((1, CO_pad), jnp.float32),   # per-channel sum
                pltpu.VMEM((1, CO_pad), jnp.float32),   # per-channel sum of squares
            ],
        ),
        compiler_params=pltpu.CompilerParams(
            dimension_semantics=("arbitrary",),          # stats + resident output -> serial
            vmem_limit_bytes=vmem_limit,
        ),
    )(patches_p, w_p, gamma_p, beta_p)

    # Un-pad and go back to NCHW.
    out = out_slab[:M, :C_out].reshape(N, H_out, W_out, C_out)
    return jnp.transpose(out, (0, 3, 1, 2))


if __name__ == "__main__":
    # Config: Conv_Bn_Activation(in_channels=4, out_channels=8, kernel_size=3,
    #                            stride=1, activation='leaky')  (bn=True, bias=False)
    N, C_in, H, W = 2, 4, 16, 16
    C_out, K, stride = 8, 3, 1

    key = jax.random.PRNGKey(0)
    k_x, k_w, k_g, k_b = jax.random.split(key, 4)
    x = jax.random.normal(k_x, (N, C_in, H, W), jnp.float32)
    weight = jax.random.normal(k_w, (C_out, C_in, K, K), jnp.float32) * 0.1
    gamma = 1.0 + 0.1 * jax.random.normal(k_g, (C_out,), jnp.float32)
    beta = 0.1 * jax.random.normal(k_b, (C_out,), jnp.float32)

    # Pure-JAX reference (same semantics as the PyTorch forward in train mode).
    pad = (K - 1) // 2
    conv = jax.lax.conv_general_dilated(
        x, weight, (stride, stride), ((pad, pad), (pad, pad)),
        dimension_numbers=("NCHW", "OIHW", "NCHW"))
    mean = conv.mean(axis=(0, 2, 3), keepdims=True)
    var = ((conv - mean) ** 2).mean(axis=(0, 2, 3), keepdims=True)
    ref = (conv - mean) / jnp.sqrt(var + 1e-5)
    ref = ref * gamma[None, :, None, None] + beta[None, :, None, None]
    ref = jnp.where(ref >= 0, ref, 0.1 * ref)

    # 1) f32-operand path: exact parity with the f32 reference.
    out_f32 = jax.block_until_ready(
        conv_bn_activation(x, weight, gamma, beta, stride=stride,
                           matmul_dtype=jnp.float32))
    assert out_f32.shape == (N, C_out, H, W)
    assert jnp.allclose(out_f32, ref, atol=1e-4, rtol=1e-4), (
        float(jnp.max(jnp.abs(out_f32 - ref))))

    # 2) bf16-operand fast path (default): only the MXU operands are quantized; BN stats,
    #    the scale/shift fold and the epilogue stay f32, so the drift is bounded.
    out_bf16 = jax.block_until_ready(
        conv_bn_activation(x, weight, gamma, beta, stride=stride))
    assert out_bf16.shape == (N, C_out, H, W)
    assert jnp.allclose(out_bf16, ref, atol=5e-2, rtol=5e-2), (
        float(jnp.max(jnp.abs(out_bf16 - ref))))

    print("KERNEL_OK")
</pallas_src>

<mosaic_0001>
module attributes {stable_mosaic.version = 11 : i64} {
  func.func @_fused_conv_bn_act_kernel(%arg0: i32, %arg1: memref<512x128xf32, #tpu.memory_space<vmem>>, %arg2: memref<128x128xf32, #tpu.memory_space<vmem>>, %arg3: memref<1x128xf32, #tpu.memory_space<vmem>>, %arg4: memref<1x128xf32, #tpu.memory_space<vmem>>, %arg5: memref<512x128xf32, #tpu.memory_space<vmem>>, %arg6: memref<1x128xf32, #tpu.memory_space<vmem>>, %arg7: memref<1x128xf32, #tpu.memory_space<vmem>>) attributes {dimension_semantics = [#tpu.dimension_semantics<arbitrary>], iteration_bounds = array<i64: 1>, scalar_prefetch = 0 : i64, scratch_operands = 2 : i64, tpu.core_type = #tpu.core_type<tc>, window_params = [{transform_indices = @transform_0, window_bounds = array<i64: 512, 128>}, {pipeline_mode = #tpu.pipeline_mode<synchronous>, transform_indices = @transform_1, window_bounds = array<i64: 128, 128>}, {pipeline_mode = #tpu.pipeline_mode<synchronous>, transform_indices = @transform_2, window_bounds = array<i64: 1, 128>}, {pipeline_mode = #tpu.pipeline_mode<synchronous>, transform_indices = @transform_3, window_bounds = array<i64: 1, 128>}, {pipeline_mode = #tpu.pipeline_mode<synchronous>, transform_indices = @transform_4, window_bounds = array<i64: 512, 128>}]} {
    %c0_i32 = arith.constant 0 : i32
    %0 = arith.cmpi eq, %arg0, %c0_i32 : i32
    %1 = arith.extui %0 : i1 to i32
    %c0_i32_0 = arith.constant 0 : i32
    %2 = arith.cmpi ne, %1, %c0_i32_0 : i32
    scf.if %2 {
      %cst_17 = arith.constant 0.000000e+00 : f32
      %24 = vector.broadcast %cst_17 : f32 to vector<1x128xf32>
      %c0_18 = arith.constant 0 : index
      %c0_19 = arith.constant 0 : index
      %25 = vector.load %arg6[%c0_18, %c0_19] : memref<1x128xf32, #tpu.memory_space<vmem>>, vector<1x128xf32>
      tpu.vector_store %arg6[%c0_18, %c0_19], %24 {strides = array<i32>} : memref<1x128xf32, #tpu.memory_space<vmem>>, vector<1x128xf32>,
      %cst_20 = arith.constant 0.000000e+00 : f32
      %26 = vector.broadcast %cst_20 : f32 to vector<1x128xf32>
      %c0_21 = arith.constant 0 : index
      %c0_22 = arith.constant 0 : index
      %27 = vector.load %arg7[%c0_21, %c0_22] : memref<1x128xf32, #tpu.memory_space<vmem>>, vector<1x128xf32>
      tpu.vector_store %arg7[%c0_21, %c0_22], %26 {strides = array<i32>} : memref<1x128xf32, #tpu.memory_space<vmem>>, vector<1x128xf32>,
    } else {
    }
    %c0 = arith.constant 0 : index
    %c0_1 = arith.constant 0 : index
    %3 = vector.load %arg1[%c0, %c0_1] : memref<512x128xf32, #tpu.memory_space<vmem>>, vector<512x128xf32>
    %c0_2 = arith.constant 0 : index
    %c0_3 = arith.constant 0 : index
    %4 = vector.load %arg2[%c0_2, %c0_3] : memref<128x128xf32, #tpu.memory_space<vmem>>, vector<128x128xf32>
    %cst = arith.constant dense<0.000000e+00> : vector<512x128xf32>
    %5 = tpu.matmul %3, %4, %cst {dimension_numbers = #tpu.dot_dimension_numbers<[1], [0], [0], [1], [0, 0, 1, 1], [], []>} : vector<512x128xf32>, vector<128x128xf32>, vector<512x128xf32> -> vector<512x128xf32>
    %c512_i32 = arith.constant 512 : i32
    %6 = arith.muli %arg0, %c512_i32 : i32
    %7 = tpu.assume_multiple %6, 512 : i32
    %8 = arith.index_cast %7 : i32 to index
    %c0_4 = arith.constant 0 : index
    %9 = vector.load %arg5[%8, %c0_4] : memref<512x128xf32, #tpu.memory_space<vmem>>, vector<512x128xf32>
    tpu.vector_store %arg5[%8, %c0_4], %5 {strides = array<i32>} : memref<512x128xf32, #tpu.memory_space<vmem>>, vector<512x128xf32>,
    %c0_5 = arith.constant 0 : index
    %c0_6 = arith.constant 0 : index
    %10 = vector.load %arg6[%c0_5, %c0_6] : memref<1x128xf32, #tpu.memory_space<vmem>>, vector<1x128xf32>
    %cst_7 = arith.constant dense<0.000000e+00> : vector<128xf32>
    %11 = vector.multi_reduction <add>, %5, %cst_7 [0] : vector<512x128xf32> to vector<128xf32>
    %12 = vector.shape_cast %11 : vector<128xf32> to vector<1x128xf32>
    %13 = arith.addf %10, %12 : vector<1x128xf32>
    %c0_8 = arith.constant 0 : index
    %c0_9 = arith.constant 0 : index
    %14 = vector.load %arg6[%c0_8, %c0_9] : memref<1x128xf32, #tpu.memory_space<vmem>>, vector<1x128xf32>
    tpu.vector_store %arg6[%c0_8, %c0_9], %13 {strides = array<i32>} : memref<1x128xf32, #tpu.memory_space<vmem>>, vector<1x128xf32>,
    %c0_10 = arith.constant 0 : index
    %c0_11 = arith.constant 0 : index
    %15 = vector.load %arg7[%c0_10, %c0_11] : memref<1x128xf32, #tpu.memory_space<vmem>>, vector<1x128xf32>
    %16 = arith.mulf %5, %5 : vector<512x128xf32>
    %cst_12 = arith.constant dense<0.000000e+00> : vector<128xf32>
    %17 = vector.multi_reduction <add>, %16, %cst_12 [0] : vector<512x128xf32> to vector<128xf32>
    %18 = vector.shape_cast %17 : vector<128xf32> to vector<1x128xf32>
    %19 = arith.addf %15, %18 : vector<1x128xf32>
    %c0_13 = arith.constant 0 : index
    %c0_14 = arith.constant 0 : index
    %20 = vector.load %arg7[%c0_13, %c0_14] : memref<1x128xf32, #tpu.memory_space<vmem>>, vector<1x128xf32>
    tpu.vector_store %arg7[%c0_13, %c0_14], %19 {strides = array<i32>} : memref<1x128xf32, #tpu.memory_space<vmem>>, vector<1x128xf32>,
    %c0_i32_15 = arith.constant 0 : i32
    %21 = arith.cmpi eq, %arg0, %c0_i32_15 : i32
    %22 = arith.extui %21 : i1 to i32
    %c0_i32_16 = arith.constant 0 : i32
    %23 = arith.cmpi ne, %22, %c0_i32_16 : i32
    scf.if %23 {
      %c0_17 = arith.constant 0 : index
      %c0_18 = arith.constant 0 : index
      %24 = vector.load %arg6[%c0_17, %c0_18] : memref<1x128xf32, #tpu.memory_space<vmem>>, vector<1x128xf32>
      %cst_19 = arith.constant 0.001953125 : f32
      %25 = vector.broadcast %cst_19 : f32 to vector<1x128xf32>
      %26 = arith.mulf %24, %25 : vector<1x128xf32>
      %c0_20 = arith.constant 0 : index
      %c0_21 = arith.constant 0 : index
      %27 = vector.load %arg7[%c0_20, %c0_21] : memref<1x128xf32, #tpu.memory_space<vmem>>, vector<1x128xf32>
      %cst_22 = arith.constant 0.001953125 : f32
      %28 = vector.broadcast %cst_22 : f32 to vector<1x128xf32>
      %29 = arith.mulf %27, %28 : vector<1x128xf32>
      %30 = arith.mulf %26, %26 : vector<1x128xf32>
      %31 = arith.subf %29, %30 : vector<1x128xf32>
      %c0_23 = arith.constant 0 : index
      %c0_24 = arith.constant 0 : index
      %32 = vector.load %arg3[%c0_23, %c0_24] : memref<1x128xf32, #tpu.memory_space<vmem>>, vector<1x128xf32>
      %cst_25 = arith.constant 9.99999974E-6 : f32
      %33 = vector.broadcast %cst_25 : f32 to vector<1x128xf32>
      %34 = arith.addf %31, %33 : vector<1x128xf32>
      %35 = math.rsqrt %34 : vector<1x128xf32>
      %36 = arith.mulf %32, %35 : vector<1x128xf32>
      %c0_26 = arith.constant 0 : index
      %c0_27 = arith.constant 0 : index
      %37 = vector.load %arg4[%c0_26, %c0_27] : memref<1x128xf32, #tpu.memory_space<vmem>>, vector<1x128xf32>
      %38 = arith.mulf %26, %36 : vector<1x128xf32>
      %39 = arith.subf %37, %38 : vector<1x128xf32>
      %c0_28 = arith.constant 0 : index
      %c0_29 = arith.constant 0 : index
      %40 = vector.load %arg5[%c0_28, %c0_29] : memref<512x128xf32, #tpu.memory_space<vmem>>, vector<512x128xf32>
      %41 = vector.broadcast %36 : vector<1x128xf32> to vector<512x128xf32>
      %42 = arith.mulf %40, %41 : vector<512x128xf32>
      %43 = vector.broadcast %39 : vector<1x128xf32> to vector<512x128xf32>
      %44 = arith.addf %42, %43 : vector<512x128xf32>
      %cst_30 = arith.constant 0.000000e+00 : f32
      %45 = vector.broadcast %cst_30 : f32 to vector<512x128xf32>
      %46 = arith.cmpf oge, %44, %45 : vector<512x128xf32>
      %cst_31 = arith.constant 1.000000e-01 : f32
      %47 = vector.broadcast %cst_31 : f32 to vector<512x128xf32>
      %48 = arith.mulf %47, %44 : vector<512x128xf32>
      %49 = arith.select %46, %44, %48 : vector<512x128xi1>, vector<512x128xf32>
      %c0_32 = arith.constant 0 : index
      %c0_33 = arith.constant 0 : index
      %50 = vector.load %arg5[%c0_32, %c0_33] : memref<512x128xf32, #tpu.memory_space<vmem>>, vector<512x128xf32>
      tpu.vector_store %arg5[%c0_32, %c0_33], %49 {strides = array<i32>} : memref<512x128xf32, #tpu.memory_space<vmem>>, vector<512x128xf32>,
    } else {
    }
    return
  }
  func.func @transform_0(%arg0: i32) -> (i32, i32) {
    %c0_i32 = arith.constant 0 : i32
    %c0_i32_0 = arith.constant 0 : i32
    return %arg0, %c0_i32 : i32, i32
  }
  func.func @transform_1(%arg0: i32) -> (i32, i32) {
    %c0_i32 = arith.constant 0 : i32
    %c0_i32_0 = arith.constant 0 : i32
    %c0_i32_1 = arith.constant 0 : i32
    return %c0_i32, %c0_i32_0 : i32, i32
  }
  func.func @transform_2(%arg0: i32) -> (i32, i32) {
    %c0_i32 = arith.constant 0 : i32
    %c0_i32_0 = arith.constant 0 : i32
    %c0_i32_1 = arith.constant 0 : i32
    return %c0_i32, %c0_i32_0 : i32, i32
  }
  func.func @transform_3(%arg0: i32) -> (i32, i32) {
    %c0_i32 = arith.constant 0 : i32
    %c0_i32_0 = arith.constant 0 : i32
    %c0_i32_1 = arith.constant 0 : i32
    return %c0_i32, %c0_i32_0 : i32, i32
  }
  func.func @transform_4(%arg0: i32) -> (i32, i32) {
    %c0_i32 = arith.constant 0 : i32
    %c0_i32_0 = arith.constant 0 : i32
    %c0_i32_1 = arith.constant 0 : i32
    return %c0_i32, %c0_i32_0 : i32, i32
  }
}

</mosaic_0001>

<llo_original>
// kernel: tpu_custom_call.1
$region0: #{tpu_custom_call.1}
  #allocation0 [shape = 'u32[]', space=smem, size = 0x4, offset = 0x4, fixed_abs, tag = 'smem constant byte address 0x4 - core index']
  #allocation1 [shape = 'u32[72,128]{1,0:T(1,128)}', space=vmem, size = 0x9000, scoped, tag = 'internal scratch']
  #allocation2 [shape = 'f32[1,128]{1,0:T(1,128)}', space=vmem, size = 0x200, scoped, tag = 'scratch operand']
  #allocation3 [shape = 'f32[1,128]{1,0:T(1,128)}', space=vmem, size = 0x200, scoped, tag = 'scratch operand']
  %s0 = inlined_call_operand.hbm [shape: f32[512,128], index: 0, kind: input, shape index: {}]
  %s1 = inlined_call_operand.hbm [shape: f32[128,128], index: 1, kind: input, shape index: {}]
  %s2 = inlined_call_operand.vmem [shape: f32[1,128], index: 2, kind: input, shape index: {}]
  %s3 = inlined_call_operand.vmem [shape: f32[1,128], index: 3, kind: input, shape index: {}]
  %s4 = inlined_call_operand.hbm [shape: f32[512,128], index: 4, kind: output, shape index: {}]
  %s5 = sld [smem:[#allocation0]]
  $region42: #{tpu_custom_call.1} parent=0
    _
  %s7 = ssub.s32 1, %s5
  %s8 = scalar_select 0, %s7, %s5
  $region1: #{tpu_custom_call.1} parent=0
    #allocation4 [shape = 'u8[262144]{0}', space=vmem, size = 0x40000, scoped, tag = 'input window, operand 0, single buffered']
    #allocation5 [shape = 's32[1]{0}', space=sflag, size = 0x4, scoped, tag = 'scoped memory for tpu_custom_call.1']
    #allocation6 [shape = 's32[1]{0}', space=sflag, size = 0x4, scoped, tag = 'scoped memory for tpu_custom_call.1']
    #allocation7 [shape = 'u8[65536]{0}', space=vmem, size = 0x10000, scoped, tag = 'input window, operand 1, single buffered']
    #allocation8 [shape = 's32[1]{0}', space=sflag, size = 0x4, scoped, tag = 'scoped memory for tpu_custom_call.1']
    #allocation9 [shape = 'u8[262144]{0}', space=vmem, size = 0x40000, scoped, tag = 'output window, operand 0, single buffered']
    %9 = vsyncpa [#allocation5], 0
    %10 = vsyncpa [#allocation8], 0
    %11 = vsyncpa [#allocation6], 0
    // Predicated region
    $region2: #{tpu_custom_call.1} parent=1 // pred_check
      _
    $region3: #{tpu_custom_call.1} parent=1 // pred_check_branch
      %13 = sbr.rel (0) target = $region5
    $region4: #{tpu_custom_call.1} parent=1 // pred_region
      %15 = vsyncadd [#allocation5], 0
      %s16 = sshll.u32 %s0, 4
      %s17 = int_to_ptr.hbm [resolvable:$true] %s16
      %s18 = sshll.u32 [#allocation4], 4
      %s19 = int_to_ptr.vmem [resolvable:$true] %s18
      %24 = dma.hbm_to_vmem [thread:$0]  %s17, 8192, %s19, [#allocation5], 128, 128, 8
    $region5: #{tpu_custom_call.1} parent=1 // pred_fallthru
      _
    // Predicated region
    $region6: #{tpu_custom_call.1} parent=1 // pred_check
      _
    $region7: #{tpu_custom_call.1} parent=1 // pred_check_branch
      %26 = sbr.rel (0) target = $region9
    $region8: #{tpu_custom_call.1} parent=1 // pred_region
      %28 = vsyncadd [#allocation8], 0
      %s29 = sshll.u32 %s1, 4
      %s30 = int_to_ptr.hbm [resolvable:$true] %s29
      %s31 = sshll.u32 [#allocation7], 4
      %s32 = int_to_ptr.vmem [resolvable:$true] %s31
      %37 = dma.hbm_to_vmem [thread:$0]  %s30, 2048, %s32, [#allocation8], 128, 128, 8
    $region9: #{tpu_custom_call.1} parent=1 // pred_fallthru
      _
    // Predicated region
    $region10: #{tpu_custom_call.1} parent=1 // pred_check
      _
    $region11: #{tpu_custom_call.1} parent=1 // pred_check_branch
      %39 = sbr.rel (0) target = $region13
    $region12: #{tpu_custom_call.1} parent=1 // pred_region
      _
    $region13: #{tpu_custom_call.1} parent=1 // pred_fallthru
      _
    // Predicated region
    $region14: #{tpu_custom_call.1} parent=1 // pred_check
      _
    $region15: #{tpu_custom_call.1} parent=1 // pred_check_branch
      %41 = sbr.rel (0) target = $region17
    $region16: #{tpu_custom_call.1} parent=1 // pred_region
      _
    $region17: #{tpu_custom_call.1} parent=1 // pred_fallthru
      _
    // Predicated region
    $region18: #{tpu_custom_call.1} parent=1 // pred_check
      _
    $region19: #{tpu_custom_call.1} parent=1 // pred_check_branch
      %43 = sbr.rel (0) target = $region21
    $region20: #{tpu_custom_call.1} parent=1 // pred_region
      %45 = dma.done [#allocation5], 8192
    $region21: #{tpu_custom_call.1} parent=1 // pred_fallthru
      _
    // Predicated region
    $region22: #{tpu_custom_call.1} parent=1 // pred_check
      _
    $region23: #{tpu_custom_call.1} parent=1 // pred_check_branch
      %47 = sbr.rel (0) target = $region25
    $region24: #{tpu_custom_call.1} parent=1 // pred_region
      %49 = dma.done [#allocation8], 2048
    $region25: #{tpu_custom_call.1} parent=1 // pred_fallthru
      _
    %p50 = scmp.eq.s32.totalorder 0, 0
    // Predicated region
    $region26: #{tpu_custom_call.1} parent=1 // pred_check
      %p51 = pneg %p50
    $region27: #{tpu_custom_call.1} parent=1 // pred_check_branch
      %53 = sbr.rel (%p51) target = $region29
    $region28: #{tpu_custom_call.1} parent=1 // pred_region
      %54 = vst [vmem:[#allocation2] sm:$0x1] 0.0
      %55 = vst [vmem:[#allocation3] sm:$0x1] 0.0
    $region29: #{tpu_custom_call.1} parent=1 // pred_fallthru
      _
    %v56 = vld [vmem:[#allocation4] sm:$0xff]
    %v57 = vld [vmem:[#allocation4 + $0x8] sm:$0xff]
    %v58 = vld [vmem:[#allocation4 + $0x10] sm:$0xff]
    %v59 = vld [vmem:[#allocation4 + $0x18] sm:$0xff]
    %v60 = vld [vmem:[#allocation4 + $0x20] sm:$0xff]
    %v61 = vld [vmem:[#allocation4 + $0x28] sm:$0xff]
    %v62 = vld [vmem:[#allocation4 + $0x30] sm:$0xff]
    %v63 = vld [vmem:[#allocation4 + $0x38] sm:$0xff]
    %v64 = vld [vmem:[#allocation4 + $0x40] sm:$0xff]
    %v65 = vld [vmem:[#allocation4 + $0x48] sm:$0xff]
    %v66 = vld [vmem:[#allocation4 + $0x50] sm:$0xff]
    %v67 = vld [vmem:[#allocation4 + $0x58] sm:$0xff]
    %v68 = vld [vmem:[#allocation4 + $0x60] sm:$0xff]
    %v69 = vld [vmem:[#allocation4 + $0x68] sm:$0xff]
    %v70 = vld [vmem:[#allocation4 + $0x70] sm:$0xff]
    %v71 = vld [vmem:[#allocation4 + $0x78] sm:$0xff]
    %v72 = vld [vmem:[#allocation4 + $0x80] sm:$0xff]
    %v73 = vld [vmem:[#allocation4 + $0x88] sm:$0xff]
    %v74 = vld [vmem:[#allocation4 + $0x90] sm:$0xff]
    %v75 = vld [vmem:[#allocation4 + $0x98] sm:$0xff]
    %v76 = vld [vmem:[#allocation4 + $0xa0] sm:$0xff]
    %v77 = vld [vmem:[#allocation4 + $0xa8] sm:$0xff]
    %v78 = vld [vmem:[#allocation4 + $0xb0] sm:$0xff]
    %v79 = vld [vmem:[#allocation4 + $0xb8] sm:$0xff]
    %v80 = vld [vmem:[#allocation4 + $0xc0] sm:$0xff]
    %v81 = vld [vmem:[#allocation4 + $0xc8] sm:$0xff]
    %v82 = vld [vmem:[#allocation4 + $0xd0] sm:$0xff]
    %v83 = vld [vmem:[#allocation4 + $0xd8] sm:$0xff]
    %v84 = vld [vmem:[#allocation4 + $0xe0] sm:$0xff]
    %v85 = vld [vmem:[#allocation4 + $0xe8] sm:$0xff]
    %v86 = vld [vmem:[#allocation4 + $0xf0] sm:$0xff]
    %v87 = vld [vmem:[#allocation4 + $0xf8] sm:$0xff]
    %v88 = vld [vmem:[#allocation4 + $0x100] sm:$0xff]
    %v89 = vld [vmem:[#allocation4 + $0x108] sm:$0xff]
    %v90 = vld [vmem:[#allocation4 + $0x110] sm:$0xff]
    %v91 = vld [vmem:[#allocation4 + $0x118] sm:$0xff]
    %v92 = vld [vmem:[#allocation4 + $0x120] sm:$0xff]
    %v93 = vld [vmem:[#allocation4 + $0x128] sm:$0xff]
    %v94 = vld [vmem:[#allocation4 + $0x130] sm:$0xff]
    %v95 = vld [vmem:[#allocation4 + $0x138] sm:$0xff]
    %v96 = vld [vmem:[#allocation4 + $0x140] sm:$0xff]
    %v97 = vld [vmem:[#allocation4 + $0x148] sm:$0xff]
    %v98 = vld [vmem:[#allocation4 + $0x150] sm:$0xff]
    %v99 = vld [vmem:[#allocation4 + $0x158] sm:$0xff]
    %v100 = vld [vmem:[#allocation4 + $0x160] sm:$0xff]
    %v101 = vld [vmem:[#allocation4 + $0x168] sm:$0xff]
    %v102 = vld [vmem:[#allocation4 + $0x170] sm:$0xff]
    %v103 = vld [vmem:[#allocation4 + $0x178] sm:$0xff]
    %v104 = vld [vmem:[#allocation4 + $0x180] sm:$0xff]
    %v105 = vld [vmem:[#allocation4 + $0x188] sm:$0xff]
    %v106 = vld [vmem:[#allocation4 + $0x190] sm:$0xff]
    %v107 = vld [vmem:[#allocation4 + $0x198] sm:$0xff]
    %v108 = vld [vmem:[#allocation4 + $0x1a0] sm:$0xff]
    %v109 = vld [vmem:[#allocation4 + $0x1a8] sm:$0xff]
    %v110 = vld [vmem:[#allocation4 + $0x1b0] sm:$0xff]
    %v111 = vld [vmem:[#allocation4 + $0x1b8] sm:$0xff]
    %v112 = vld [vmem:[#allocation4 + $0x1c0] sm:$0xff]
    %v113 = vld [vmem:[#allocation4 + $0x1c8] sm:$0xff]
    %v114 = vld [vmem:[#allocation4 + $0x1d0] sm:$0xff]
    %v115 = vld [vmem:[#allocation4 + $0x1d8] sm:$0xff]
    %v116 = vld [vmem:[#allocation4 + $0x1e0] sm:$0xff]
    %v117 = vld [vmem:[#allocation4 + $0x1e8] sm:$0xff]
    %v118 = vld [vmem:[#allocation4 + $0x1f0] sm:$0xff]
    %v119 = vld [vmem:[#allocation4 + $0x1f8] sm:$0xff]
    %v120 = vld [vmem:[#allocation7] sm:$0xff]
    %v121 = vld [vmem:[#allocation7 + $0x8] sm:$0xff]
    %v122 = vld [vmem:[#allocation7 + $0x10] sm:$0xff]
    %v123 = vld [vmem:[#allocation7 + $0x18] sm:$0xff]
    %v124 = vld [vmem:[#allocation7 + $0x20] sm:$0xff]
    %v125 = vld [vmem:[#allocation7 + $0x28] sm:$0xff]
    %v126 = vld [vmem:[#allocation7 + $0x30] sm:$0xff]
    %v127 = vld [vmem:[#allocation7 + $0x38] sm:$0xff]
    %v128 = vld [vmem:[#allocation7 + $0x40] sm:$0xff]
    %v129 = vld [vmem:[#allocation7 + $0x48] sm:$0xff]
    %v130 = vld [vmem:[#allocation7 + $0x50] sm:$0xff]
    %v131 = vld [vmem:[#allocation7 + $0x58] sm:$0xff]
    %v132 = vld [vmem:[#allocation7 + $0x60] sm:$0xff]
    %v133 = vld [vmem:[#allocation7 + $0x68] sm:$0xff]
    %v134 = vld [vmem:[#allocation7 + $0x70] sm:$0xff]
    %v135 = vld [vmem:[#allocation7 + $0x78] sm:$0xff]
    %136 = vmatpush.msra.mxu0 %v135
    %137 = vmatpush.msra.mxu0 %v134
    %138 = vmatpush.msra.mxu0 %v133
    %139 = vmatpush.msra.mxu0 %v132
    %140 = vmatpush.msra.mxu0 %v131
    %141 = vmatpush.msra.mxu0 %v130
    %142 = vmatpush.msra.mxu0 %v129
    %143 = vmatpush.msra.mxu0 %v128
    %144 = vmatpush.msra.mxu0 %v127
    %145 = vmatpush.msra.mxu0 %v126
    %146 = vmatpush.msra.mxu0 %v125
    %147 = vmatpush.msra.mxu0 %v124
    %148 = vmatpush.msra.mxu0 %v123
    %149 = vmatpush.msra.mxu0 %v122
    %150 = vmatpush.msra.mxu0 %v121
    %151 = vmatpush.msra.mxu0 %v120
    %152 = vmatmul.f32.gmra.mxu0 %v56
    %v153 = vpop.f32.mrf.mxu0
    %v154 = vadd.f32 0.0, %v153
    %155 = vmatmul.f32.gmra.mxu0 %v57
    %v156 = vpop.f32.mrf.mxu0
    %v157 = vadd.f32 0.0, %v156
    %158 = vmatmul.f32.gmra.mxu0 %v58
    %v159 = vpop.f32.mrf.mxu0
    %v160 = vadd.f32 0.0, %v159
    %161 = vmatmul.f32.gmra.mxu0 %v59
    %v162 = vpop.f32.mrf.mxu0
    %v163 = vadd.f32 0.0, %v162
    %164 = vmatmul.f32.gmra.mxu0 %v60
    %v165 = vpop.f32.mrf.mxu0
    %v166 = vadd.f32 0.0, %v165
    %167 = vmatmul.f32.gmra.mxu0 %v61
    %v168 = vpop.f32.mrf.mxu0
    %v169 = vadd.f32 0.0, %v168
    %170 = vmatmul.f32.gmra.mxu0 %v62
    %v171 = vpop.f32.mrf.mxu0
    %v172 = vadd.f32 0.0, %v171
    %173 = vmatmul.f32.gmra.mxu0 %v63
    %v174 = vpop.f32.mrf.mxu0
    %v175 = vadd.f32 0.0, %v174
    %176 = vmatmul.f32.gmra.mxu0 %v64
    %v177 = vpop.f32.mrf.mxu0
    %v178 = vadd.f32 0.0, %v177
    %179 = vmatmul.f32.gmra.mxu0 %v65
    %v180 = vpop.f32.mrf.mxu0
    %v181 = vadd.f32 0.0, %v180
    %182 = vmatmul.f32.gmra.mxu0 %v66
    %v183 = vpop.f32.mrf.mxu0
    %v184 = vadd.f32 0.0, %v183
    %185 = vmatmul.f32.gmra.mxu0 %v67
    %v186 = vpop.f32.mrf.mxu0
    %v187 = vadd.f32 0.0, %v186
    %188 = vmatmul.f32.gmra.mxu0 %v68
    %v189 = vpop.f32.mrf.mxu0
    %v190 = vadd.f32 0.0, %v189
    %191 = vmatmul.f32.gmra.mxu0 %v69
    %v192 = vpop.f32.mrf.mxu0
    %v193 = vadd.f32 0.0, %v192
    %194 = vmatmul.f32.gmra.mxu0 %v70
    %v195 = vpop.f32.mrf.mxu0
    %v196 = vadd.f32 0.0, %v195
    %197 = vmatmul.f32.gmra.mxu0 %v71
    %v198 = vpop.f32.mrf.mxu0
    %v199 = vadd.f32 0.0, %v198
    %200 = vmatmul.f32.gmra.mxu0 %v72
    %v201 = vpop.f32.mrf.mxu0
    %v202 = vadd.f32 0.0, %v201
    %203 = vmatmul.f32.gmra.mxu0 %v73
    %v204 = vpop.f32.mrf.mxu0
    %v205 = vadd.f32 0.0, %v204
    %206 = vmatmul.f32.gmra.mxu0 %v74
    %v207 = vpop.f32.mrf.mxu0
    %v208 = vadd.f32 0.0, %v207
    %209 = vmatmul.f32.gmra.mxu0 %v75
    %v210 = vpop.f32.mrf.mxu0
    %v211 = vadd.f32 0.0, %v210
    %212 = vmatmul.f32.gmra.mxu0 %v76
    %v213 = vpop.f32.mrf.mxu0
    %v214 = vadd.f32 0.0, %v213
    %215 = vmatmul.f32.gmra.mxu0 %v77
    %v216 = vpop.f32.mrf.mxu0
    %v217 = vadd.f32 0.0, %v216
    %218 = vmatmul.f32.gmra.mxu0 %v78
    %v219 = vpop.f32.mrf.mxu0
    %v220 = vadd.f32 0.0, %v219
    %221 = vmatmul.f32.gmra.mxu0 %v79
    %v222 = vpop.f32.mrf.mxu0
    %v223 = vadd.f32 0.0, %v222
    %224 = vmatmul.f32.gmra.mxu0 %v80
    %v225 = vpop.f32.mrf.mxu0
    %v226 = vadd.f32 0.0, %v225
    %227 = vmatmul.f32.gmra.mxu0 %v81
    %v228 = vpop.f32.mrf.mxu0
    %v229 = vadd.f32 0.0, %v228
    %230 = vmatmul.f32.gmra.mxu0 %v82
    %v231 = vpop.f32.mrf.mxu0
    %v232 = vadd.f32 0.0, %v231
    %233 = vmatmul.f32.gmra.mxu0 %v83
    %v234 = vpop.f32.mrf.mxu0
    %v235 = vadd.f32 0.0, %v234
    %236 = vmatmul.f32.gmra.mxu0 %v84
    %v237 = vpop.f32.mrf.mxu0
    %v238 = vadd.f32 0.0, %v237
    %239 = vmatmul.f32.gmra.mxu0 %v85
    %v240 = vpop.f32.mrf.mxu0
    %v241 = vadd.f32 0.0, %v240
    %242 = vmatmul.f32.gmra.mxu0 %v86
    %v243 = vpop.f32.mrf.mxu0
    %v244 = vadd.f32 0.0, %v243
    %245 = vmatmul.f32.gmra.mxu0 %v87
    %v246 = vpop.f32.mrf.mxu0
    %v247 = vadd.f32 0.0, %v246
    %248 = vmatmul.f32.gmra.mxu0 %v88
    %v249 = vpop.f32.mrf.mxu0
    %v250 = vadd.f32 0.0, %v249
    %251 = vmatmul.f32.gmra.mxu0 %v89
    %v252 = vpop.f32.mrf.mxu0
    %v253 = vadd.f32 0.0, %v252
    %254 = vmatmul.f32.gmra.mxu0 %v90
    %v255 = vpop.f32.mrf.mxu0
    %v256 = vadd.f32 0.0, %v255
    %257 = vmatmul.f32.gmra.mxu0 %v91
    %v258 = vpop.f32.mrf.mxu0
    %v259 = vadd.f32 0.0, %v258
    %260 = vmatmul.f32.gmra.mxu0 %v92
    %v261 = vpop.f32.mrf.mxu0
    %v262 = vadd.f32 0.0, %v261
    %263 = vmatmul.f32.gmra.mxu0 %v93
    %v264 = vpop.f32.mrf.mxu0
    %v265 = vadd.f32 0.0, %v264
    %266 = vmatmul.f32.gmra.mxu0 %v94
    %v267 = vpop.f32.mrf.mxu0
    %v268 = vadd.f32 0.0, %v267
    %269 = vmatmul.f32.gmra.mxu0 %v95
    %v270 = vpop.f32.mrf.mxu0
    %v271 = vadd.f32 0.0, %v270
    %272 = vmatmul.f32.gmra.mxu0 %v96
    %v273 = vpop.f32.mrf.mxu0
    %v274 = vadd.f32 0.0, %v273
    %275 = vmatmul.f32.gmra.mxu0 %v97
    %v276 = vpop.f32.mrf.mxu0
    %v277 = vadd.f32 0.0, %v276
    %278 = vmatmul.f32.gmra.mxu0 %v98
    %v279 = vpop.f32.mrf.mxu0
    %v280 = vadd.f32 0.0, %v279
    %281 = vmatmul.f32.gmra.mxu0 %v99
    %v282 = vpop.f32.mrf.mxu0
    %v283 = vadd.f32 0.0, %v282
    %284 = vmatmul.f32.gmra.mxu0 %v100
    %v285 = vpop.f32.mrf.mxu0
    %v286 = vadd.f32 0.0, %v285
    %287 = vmatmul.f32.gmra.mxu0 %v101
    %v288 = vpop.f32.mrf.mxu0
    %v289 = vadd.f32 0.0, %v288
    %290 = vmatmul.f32.gmra.mxu0 %v102
    %v291 = vpop.f32.mrf.mxu0
    %v292 = vadd.f32 0.0, %v291
    %293 = vmatmul.f32.gmra.mxu0 %v103
    %v294 = vpop.f32.mrf.mxu0
    %v295 = vadd.f32 0.0, %v294
    %296 = vmatmul.f32.gmra.mxu0 %v104
    %v297 = vpop.f32.mrf.mxu0
    %v298 = vadd.f32 0.0, %v297
    %299 = vmatmul.f32.gmra.mxu0 %v105
    %v300 = vpop.f32.mrf.mxu0
    %v301 = vadd.f32 0.0, %v300
    %302 = vmatmul.f32.gmra.mxu0 %v106
    %v303 = vpop.f32.mrf.mxu0
    %v304 = vadd.f32 0.0, %v303
    %305 = vmatmul.f32.gmra.mxu0 %v107
    %v306 = vpop.f32.mrf.mxu0
    %v307 = vadd.f32 0.0, %v306
    %308 = vmatmul.f32.gmra.mxu0 %v108
    %v309 = vpop.f32.mrf.mxu0
    %v310 = vadd.f32 0.0, %v309
    %311 = vmatmul.f32.gmra.mxu0 %v109
    %v312 = vpop.f32.mrf.mxu0
    %v313 = vadd.f32 0.0, %v312
    %314 = vmatmul.f32.gmra.mxu0 %v110
    %v315 = vpop.f32.mrf.mxu0
    %v316 = vadd.f32 0.0, %v315
    %317 = vmatmul.f32.gmra.mxu0 %v111
    %v318 = vpop.f32.mrf.mxu0
    %v319 = vadd.f32 0.0, %v318
    %320 = vmatmul.f32.gmra.mxu0 %v112
    %v321 = vpop.f32.mrf.mxu0
    %v322 = vadd.f32 0.0, %v321
    %323 = vmatmul.f32.gmra.mxu0 %v113
    %v324 = vpop.f32.mrf.mxu0
    %v325 = vadd.f32 0.0, %v324
    %326 = vmatmul.f32.gmra.mxu0 %v114
    %v327 = vpop.f32.mrf.mxu0
    %v328 = vadd.f32 0.0, %v327
    %329 = vmatmul.f32.gmra.mxu0 %v115
    %v330 = vpop.f32.mrf.mxu0
    %v331 = vadd.f32 0.0, %v330
    %332 = vmatmul.f32.gmra.mxu0 %v116
    %v333 = vpop.f32.mrf.mxu0
    %v334 = vadd.f32 0.0, %v333
    %335 = vmatmul.f32.gmra.mxu0 %v117
    %v336 = vpop.f32.mrf.mxu0
    %v337 = vadd.f32 0.0, %v336
    %338 = vmatmul.f32.gmra.mxu0 %v118
    %v339 = vpop.f32.mrf.mxu0
    %v340 = vadd.f32 0.0, %v339
    %341 = vmatmul.f32.gmra.mxu0 %v119
    %v342 = vpop.f32.mrf.mxu0
    %v343 = vadd.f32 0.0, %v342
    %344 = vdwg.mxu0
    %s345 = smul.u32 0, 512
    %s346 = scalar_lea.vmem [#allocation9], %s345
    %347 = vst [vmem:[%s346] sm:$0xff] %v154
    %348 = vst [vmem:[%s346 + $0x8] sm:$0xff] %v157
    %349 = vst [vmem:[%s346 + $0x10] sm:$0xff] %v160
    %350 = vst [vmem:[%s346 + $0x18] sm:$0xff] %v163
    %351 = vst [vmem:[%s346 + $0x20] sm:$0xff] %v166
    %352 = vst [vmem:[%s346 + $0x28] sm:$0xff] %v169
    %353 = vst [vmem:[%s346 + $0x30] sm:$0xff] %v172
    %354 = vst [vmem:[%s346 + $0x38] sm:$0xff] %v175
    %355 = vst [vmem:[%s346 + $0x40] sm:$0xff] %v178
    %356 = vst [vmem:[%s346 + $0x48] sm:$0xff] %v181
    %357 = vst [vmem:[%s346 + $0x50] sm:$0xff] %v184
    %358 = vst [vmem:[%s346 + $0x58] sm:$0xff] %v187
    %359 = vst [vmem:[%s346 + $0x60] sm:$0xff] %v190
    %360 = vst [vmem:[%s346 + $0x68] sm:$0xff] %v193
    %361 = vst [vmem:[%s346 + $0x70] sm:$0xff] %v196
    %362 = vst [vmem:[%s346 + $0x78] sm:$0xff] %v199
    %363 = vst [vmem:[%s346 + $0x80] sm:$0xff] %v202
    %364 = vst [vmem:[%s346 + $0x88] sm:$0xff] %v205
    %365 = vst [vmem:[%s346 + $0x90] sm:$0xff] %v208
    %366 = vst [vmem:[%s346 + $0x98] sm:$0xff] %v211
    %367 = vst [vmem:[%s346 + $0xa0] sm:$0xff] %v214
    %368 = vst [vmem:[%s346 + $0xa8] sm:$0xff] %v217
    %369 = vst [vmem:[%s346 + $0xb0] sm:$0xff] %v220
    %370 = vst [vmem:[%s346 + $0xb8] sm:$0xff] %v223
    %371 = vst [vmem:[%s346 + $0xc0] sm:$0xff] %v226
    %372 = vst [vmem:[%s346 + $0xc8] sm:$0xff] %v229
    %373 = vst [vmem:[%s346 + $0xd0] sm:$0xff] %v232
    %374 = vst [vmem:[%s346 + $0xd8] sm:$0xff] %v235
    %375 = vst [vmem:[%s346 + $0xe0] sm:$0xff] %v238
    %376 = vst [vmem:[%s346 + $0xe8] sm:$0xff] %v241
    %377 = vst [vmem:[%s346 + $0xf0] sm:$0xff] %v244
    %378 = vst [vmem:[%s346 + $0xf8] sm:$0xff] %v247
    %379 = vst [vmem:[%s346 + $0x100] sm:$0xff] %v250
    %380 = vst [vmem:[%s346 + $0x108] sm:$0xff] %v253
    %381 = vst [vmem:[%s346 + $0x110] sm:$0xff] %v256
    %382 = vst [vmem:[%s346 + $0x118] sm:$0xff] %v259
    %383 = vst [vmem:[%s346 + $0x120] sm:$0xff] %v262
    %384 = vst [vmem:[%s346 + $0x128] sm:$0xff] %v265
    %385 = vst [vmem:[%s346 + $0x130] sm:$0xff] %v268
    %386 = vst [vmem:[%s346 + $0x138] sm:$0xff] %v271
    %387 = vst [vmem:[%s346 + $0x140] sm:$0xff] %v274
    %388 = vst [vmem:[%s346 + $0x148] sm:$0xff] %v277
    %389 = vst [vmem:[%s346 + $0x150] sm:$0xff] %v280
    %390 = vst [vmem:[%s346 + $0x158] sm:$0xff] %v283
    %391 = vst [vmem:[%s346 + $0x160] sm:$0xff] %v286
    %392 = vst [vmem:[%s346 + $0x168] sm:$0xff] %v289
    %393 = vst [vmem:[%s346 + $0x170] sm:$0xff] %v292
    %394 = vst [vmem:[%s346 + $0x178] sm:$0xff] %v295
    %395 = vst [vmem:[%s346 + $0x180] sm:$0xff] %v298
    %396 = vst [vmem:[%s346 + $0x188] sm:$0xff] %v301
    %397 = vst [vmem:[%s346 + $0x190] sm:$0xff] %v304
    %398 = vst [vmem:[%s346 + $0x198] sm:$0xff] %v307
    %399 = vst [vmem:[%s346 + $0x1a0] sm:$0xff] %v310
    %400 = vst [vmem:[%s346 + $0x1a8] sm:$0xff] %v313
    %401 = vst [vmem:[%s346 + $0x1b0] sm:$0xff] %v316
    %402 = vst [vmem:[%s346 + $0x1b8] sm:$0xff] %v319
    %403 = vst [vmem:[%s346 + $0x1c0] sm:$0xff] %v322
    %404 = vst [vmem:[%s346 + $0x1c8] sm:$0xff] %v325
    %405 = vst [vmem:[%s346 + $0x1d0] sm:$0xff] %v328
    %406 = vst [vmem:[%s346 + $0x1d8] sm:$0xff] %v331
    %407 = vst [vmem:[%s346 + $0x1e0] sm:$0xff] %v334
    %408 = vst [vmem:[%s346 + $0x1e8] sm:$0xff] %v337
    %409 = vst [vmem:[%s346 + $0x1f0] sm:$0xff] %v340
    %410 = vst [vmem:[%s346 + $0x1f8] sm:$0xff] %v343
    %v411 = vld [vmem:[#allocation2] sm:$0x1]
    %v412 = vadd.f32 %v154, %v157
    %v413 = vadd.f32 %v412, %v160
    %v414 = vadd.f32 %v413, %v163
    %v415 = vadd.f32 %v414, %v166
    %v416 = vadd.f32 %v415, %v169
    %v417 = vadd.f32 %v416, %v172
    %v418 = vadd.f32 %v417, %v175
    %v419 = vadd.f32 %v418, %v178
    %v420 = vadd.f32 %v419, %v181
    %v421 = vadd.f32 %v420, %v184
    %v422 = vadd.f32 %v421, %v187
    %v423 = vadd.f32 %v422, %v190
    %v424 = vadd.f32 %v423, %v193
    %v425 = vadd.f32 %v424, %v196
    %v426 = vadd.f32 %v425, %v199
    %v427 = vadd.f32 %v426, %v202
    %v428 = vadd.f32 %v427, %v205
    %v429 = vadd.f32 %v428, %v208
    %v430 = vadd.f32 %v429, %v211
    %v431 = vadd.f32 %v430, %v214
    %v432 = vadd.f32 %v431, %v217
    %v433 = vadd.f32 %v432, %v220
    %v434 = vadd.f32 %v433, %v223
    %v435 = vadd.f32 %v434, %v226
    %v436 = vadd.f32 %v435, %v229
    %v437 = vadd.f32 %v436, %v232
    %v438 = vadd.f32 %v437, %v235
    %v439 = vadd.f32 %v438, %v238
    %v440 = vadd.f32 %v439, %v241
    %v441 = vadd.f32 %v440, %v244
    %v442 = vadd.f32 %v441, %v247
    %v443 = vadd.f32 %v442, %v250
    %v444 = vadd.f32 %v443, %v253
    %v445 = vadd.f32 %v444, %v256
    %v446 = vadd.f32 %v445, %v259
    %v447 = vadd.f32 %v446, %v262
    %v448 = vadd.f32 %v447, %v265
    %v449 = vadd.f32 %v448, %v268
    %v450 = vadd.f32 %v449, %v271
    %v451 = vadd.f32 %v450, %v274
    %v452 = vadd.f32 %v451, %v277
    %v453 = vadd.f32 %v452, %v280
    %v454 = vadd.f32 %v453, %v283
    %v455 = vadd.f32 %v454, %v286
    %v456 = vadd.f32 %v455, %v289
    %v457 = vadd.f32 %v456, %v292
    %v458 = vadd.f32 %v457, %v295
    %v459 = vadd.f32 %v458, %v298
    %v460 = vadd.f32 %v459, %v301
    %v461 = vadd.f32 %v460, %v304
    %v462 = vadd.f32 %v461, %v307
    %v463 = vadd.f32 %v462, %v310
    %v464 = vadd.f32 %v463, %v313
    %v465 = vadd.f32 %v464, %v316
    %v466 = vadd.f32 %v465, %v319
    %v467 = vadd.f32 %v466, %v322
    %v468 = vadd.f32 %v467, %v325
    %v469 = vadd.f32 %v468, %v328
    %v470 = vadd.f32 %v469, %v331
    %v471 = vadd.f32 %v470, %v334
    %v472 = vadd.f32 %v471, %v337
    %v473 = vadd.f32 %v472, %v340
    %v474 = vadd.f32 %v473, %v343
    %v475 = vrot.slane %v474, 4
    %v476 = vadd.f32 %v474, %v475
    %v477 = vrot.slane %v476, 2
    %v478 = vadd.f32 %v476, %v477
    %v479 = vrot.slane %v478, 1
    %v480 = vadd.f32 %v478, %v479
    %v481 = vadd.f32 %v411, %v480
    %482 = vst [vmem:[#allocation2] sm:$0x1] %v481
    %v483 = vld [vmem:[#allocation3] sm:$0x1]
    %v484 = vmul.f32 %v154, %v154
    %v485 = vmul.f32 %v157, %v157
    %v486 = vmul.f32 %v160, %v160
    %v487 = vmul.f32 %v163, %v163
    %v488 = vmul.f32 %v166, %v166
    %v489 = vmul.f32 %v169, %v169
    %v490 = vmul.f32 %v172, %v172
    %v491 = vmul.f32 %v175, %v175
    %v492 = vmul.f32 %v178, %v178
    %v493 = vmul.f32 %v181, %v181
    %v494 = vmul.f32 %v184, %v184
    %v495 = vmul.f32 %v187, %v187
    %v496 = vmul.f32 %v190, %v190
    %v497 = vmul.f32 %v193, %v193
    %v498 = vmul.f32 %v196, %v196
    %v499 = vmul.f32 %v199, %v199
    %v500 = vmul.f32 %v202, %v202
    %v501 = vmul.f32 %v205, %v205
    %v502 = vmul.f32 %v208, %v208
    %v503 = vmul.f32 %v211, %v211
    %v504 = vmul.f32 %v214, %v214
    %v505 = vmul.f32 %v217, %v217
    %v506 = vmul.f32 %v220, %v220
    %v507 = vmul.f32 %v223, %v223
    %v508 = vmul.f32 %v226, %v226
    %v509 = vmul.f32 %v229, %v229
    %v510 = vmul.f32 %v232, %v232
    %v511 = vmul.f32 %v235, %v235
    %v512 = vmul.f32 %v238, %v238
    %v513 = vmul.f32 %v241, %v241
    %v514 = vmul.f32 %v244, %v244
    %v515 = vmul.f32 %v247, %v247
    %v516 = vmul.f32 %v250, %v250
    %v517 = vmul.f32 %v253, %v253
    %v518 = vmul.f32 %v256, %v256
    %v519 = vmul.f32 %v259, %v259
    %v520 = vmul.f32 %v262, %v262
    %v521 = vmul.f32 %v265, %v265
    %v522 = vmul.f32 %v268, %v268
    %v523 = vmul.f32 %v271, %v271
    %v524 = vmul.f32 %v274, %v274
    %v525 = vmul.f32 %v277, %v277
    %v526 = vmul.f32 %v280, %v280
    %v527 = vmul.f32 %v283, %v283
    %v528 = vmul.f32 %v286, %v286
    %v529 = vmul.f32 %v289, %v289
    %v530 = vmul.f32 %v292, %v292
    %v531 = vmul.f32 %v295, %v295
    %v532 = vmul.f32 %v298, %v298
    %v533 = vmul.f32 %v301, %v301
    %v534 = vmul.f32 %v304, %v304
    %v535 = vmul.f32 %v307, %v307
    %v536 = vmul.f32 %v310, %v310
    %v537 = vmul.f32 %v313, %v313
    %v538 = vmul.f32 %v316, %v316
    %v539 = vmul.f32 %v319, %v319
    %v540 = vmul.f32 %v322, %v322
    %v541 = vmul.f32 %v325, %v325
    %v542 = vmul.f32 %v328, %v328
    %v543 = vmul.f32 %v331, %v331
    %v544 = vmul.f32 %v334, %v334
    %v545 = vmul.f32 %v337, %v337
    %v546 = vmul.f32 %v340, %v340
    %v547 = vmul.f32 %v343, %v343
    %v548 = vadd.f32 %v484, %v485
    %v549 = vadd.f32 %v548, %v486
    %v550 = vadd.f32 %v549, %v487
    %v551 = vadd.f32 %v550, %v488
    %v552 = vadd.f32 %v551, %v489
    %v553 = vadd.f32 %v552, %v490
    %v554 = vadd.f32 %v553, %v491
    %v555 = vadd.f32 %v554, %v492
    %v556 = vadd.f32 %v555, %v493
    %v557 = vadd.f32 %v556, %v494
    %v558 = vadd.f32 %v557, %v495
    %v559 = vadd.f32 %v558, %v496
    %v560 = vadd.f32 %v559, %v497
    %v561 = vadd.f32 %v560, %v498
    %v562 = vadd.f32 %v561, %v499
    %v563 = vadd.f32 %v562, %v500
    %v564 = vadd.f32 %v563, %v501
    %v565 = vadd.f32 %v564, %v502
    %v566 = vadd.f32 %v565, %v503
    %v567 = vadd.f32 %v566, %v504
    %v568 = vadd.f32 %v567, %v505
    %v569 = vadd.f32 %v568, %v506
    %v570 = vadd.f32 %v569, %v507
    %v571 = vadd.f32 %v570, %v508
    %v572 = vadd.f32 %v571, %v509
    %v573 = vadd.f32 %v572, %v510
    %v574 = vadd.f32 %v573, %v511
    %v575 = vadd.f32 %v574, %v512
    %v576 = vadd.f32 %v575, %v513
    %v577 = vadd.f32 %v576, %v514
    %v578 = vadd.f32 %v577, %v515
    %v579 = vadd.f32 %v578, %v516
    %v580 = vadd.f32 %v579, %v517
    %v581 = vadd.f32 %v580, %v518
    %v582 = vadd.f32 %v581, %v519
    %v583 = vadd.f32 %v582, %v520
    %v584 = vadd.f32 %v583, %v521
    %v585 = vadd.f32 %v584, %v522
    %v586 = vadd.f32 %v585, %v523
    %v587 = vadd.f32 %v586, %v524
    %v588 = vadd.f32 %v587, %v525
    %v589 = vadd.f32 %v588, %v526
    %v590 = vadd.f32 %v589, %v527
    %v591 = vadd.f32 %v590, %v528
    %v592 = vadd.f32 %v591, %v529
    %v593 = vadd.f32 %v592, %v530
    %v594 = vadd.f32 %v593, %v531
    %v595 = vadd.f32 %v594, %v532
    %v596 = vadd.f32 %v595, %v533
    %v597 = vadd.f32 %v596, %v534
    %v598 = vadd.f32 %v597, %v535
    %v599 = vadd.f32 %v598, %v536
    %v600 = vadd.f32 %v599, %v537
    %v601 = vadd.f32 %v600, %v538
    %v602 = vadd.f32 %v601, %v539
    %v603 = vadd.f32 %v602, %v540
    %v604 = vadd.f32 %v603, %v541
    %v605 = vadd.f32 %v604, %v542
    %v606 = vadd.f32 %v605, %v543
    %v607 = vadd.f32 %v606, %v544
    %v608 = vadd.f32 %v607, %v545
    %v609 = vadd.f32 %v608, %v546
    %v610 = vadd.f32 %v609, %v547
    %v611 = vrot.slane %v610, 4
    %v612 = vadd.f32 %v610, %v611
    %v613 = vrot.slane %v612, 2
    %v614 = vadd.f32 %v612, %v613
    %v615 = vrot.slane %v614, 1
    %v616 = vadd.f32 %v614, %v615
    %v617 = vadd.f32 %v483, %v616
    %618 = vst [vmem:[#allocation3] sm:$0x1] %v617
    // Predicated region
    $region30: #{tpu_custom_call.1} parent=1 // pred_check
      %p619 = pneg %p50
    $region31: #{tpu_custom_call.1} parent=1 // pred_check_branch
      %621 = sbr.rel (%p619) target = $region33
    $region32: #{tpu_custom_call.1} parent=1 // pred_region
      %v622 = vld [vmem:[#allocation2] sm:$0x1]
      %v623 = vmul.f32 %v622, 0.001953125
      %v624 = vld [vmem:[#allocation3] sm:$0x1]
      %v625 = vmul.f32 %v624, 0.001953125
      %v626 = vmul.f32 %v623, %v623
      %v627 = vsub.f32 %v625, %v626
      %v628 = vld [vmem:[%s2] sm:$0x1]
      %v629 = vadd.f32 %v627, 1e-05
      %v630 = vrsqrt.pop %v629
      %v631 = vmul.f32 %v630, %v629
      %v632 = vmul.f32 %v631, %v630
      %v633 = vmul.f32 0.5, %v632
      %v634 = vsub.f32 1.5, %v633
      %v635 = vmul.f32 %v630, %v634
      %vm636 = vweird.f32 %v629
      %vm637 = vweird.f32 %v630
      %vm638 = vmor %vm636, %vm637
      %v639 = vsel %vm638, %v630, %v635
      %v640 = vmul.f32 %v628, %v639
      %v641 = vld [vmem:[%s3] sm:$0x1]
      %v642 = vmul.f32 %v623, %v640
      %v643 = vsub.f32 %v641, %v642
      %v644 = vld [vmem:[#allocation9] sm:$0xff]
      %v645 = vld [vmem:[#allocation9 + $0x8] sm:$0xff]
      %v646 = vld [vmem:[#allocation9 + $0x10] sm:$0xff]
      %v647 = vld [vmem:[#allocation9 + $0x18] sm:$0xff]
      %v648 = vld [vmem:[#allocation9 + $0x20] sm:$0xff]
      %v649 = vld [vmem:[#allocation9 + $0x28] sm:$0xff]
      %v650 = vld [vmem:[#allocation9 + $0x30] sm:$0xff]
      %v651 = vld [vmem:[#allocation9 + $0x38] sm:$0xff]
      %v652 = vld [vmem:[#allocation9 + $0x40] sm:$0xff]
      %v653 = vld [vmem:[#allocation9 + $0x48] sm:$0xff]
      %v654 = vld [vmem:[#allocation9 + $0x50] sm:$0xff]
      %v655 = vld [vmem:[#allocation9 + $0x58] sm:$0xff]
      %v656 = vld [vmem:[#allocation9 + $0x60] sm:$0xff]
      %v657 = vld [vmem:[#allocation9 + $0x68] sm:$0xff]
      %v658 = vld [vmem:[#allocation9 + $0x70] sm:$0xff]
      %v659 = vld [vmem:[#allocation9 + $0x78] sm:$0xff]
      %v660 = vld [vmem:[#allocation9 + $0x80] sm:$0xff]
      %v661 = vld [vmem:[#allocation9 + $0x88] sm:$0xff]
      %v662 = vld [vmem:[#allocation9 + $0x90] sm:$0xff]
      %v663 = vld [vmem:[#allocation9 + $0x98] sm:$0xff]
      %v664 = vld [vmem:[#allocation9 + $0xa0] sm:$0xff]
      %v665 = vld [vmem:[#allocation9 + $0xa8] sm:$0xff]
      %v666 = vld [vmem:[#allocation9 + $0xb0] sm:$0xff]
      %v667 = vld [vmem:[#allocation9 + $0xb8] sm:$0xff]
      %v668 = vld [vmem:[#allocation9 + $0xc0] sm:$0xff]
      %v669 = vld [vmem:[#allocation9 + $0xc8] sm:$0xff]
      %v670 = vld [vmem:[#allocation9 + $0xd0] sm:$0xff]
      %v671 = vld [vmem:[#allocation9 + $0xd8] sm:$0xff]
      %v672 = vld [vmem:[#allocation9 + $0xe0] sm:$0xff]
      %v673 = vld [vmem:[#allocation9 + $0xe8] sm:$0xff]
      %v674 = vld [vmem:[#allocation9 + $0xf0] sm:$0xff]
      %v675 = vld [vmem:[#allocation9 + $0xf8] sm:$0xff]
      %v676 = vld [vmem:[#allocation9 + $0x100] sm:$0xff]
      %v677 = vld [vmem:[#allocation9 + $0x108] sm:$0xff]
      %v678 = vld [vmem:[#allocation9 + $0x110] sm:$0xff]
      %v679 = vld [vmem:[#allocation9 + $0x118] sm:$0xff]
      %v680 = vld [vmem:[#allocation9 + $0x120] sm:$0xff]
      %v681 = vld [vmem:[#allocation9 + $0x128] sm:$0xff]
      %v682 = vld [vmem:[#allocation9 + $0x130] sm:$0xff]
      %v683 = vld [vmem:[#allocation9 + $0x138] sm:$0xff]
      %v684 = vld [vmem:[#allocation9 + $0x140] sm:$0xff]
      %v685 = vld [vmem:[#allocation9 + $0x148] sm:$0xff]
      %v686 = vld [vmem:[#allocation9 + $0x150] sm:$0xff]
      %v687 = vld [vmem:[#allocation9 + $0x158] sm:$0xff]
      %v688 = vld [vmem:[#allocation9 + $0x160] sm:$0xff]
      %v689 = vld [vmem:[#allocation9 + $0x168] sm:$0xff]
      %v690 = vld [vmem:[#allocation9 + $0x170] sm:$0xff]
      %v691 = vld [vmem:[#allocation9 + $0x178] sm:$0xff]
      %v692 = vld [vmem:[#allocation9 + $0x180] sm:$0xff]
      %v693 = vld [vmem:[#allocation9 + $0x188] sm:$0xff]
      %v694 = vld [vmem:[#allocation9 + $0x190] sm:$0xff]
      %v695 = vld [vmem:[#allocation9 + $0x198] sm:$0xff]
      %v696 = vld [vmem:[#allocation9 + $0x1a0] sm:$0xff]
      %v697 = vld [vmem:[#allocation9 + $0x1a8] sm:$0xff]
      %v698 = vld [vmem:[#allocation9 + $0x1b0] sm:$0xff]
      %v699 = vld [vmem:[#allocation9 + $0x1b8] sm:$0xff]
      %v700 = vld [vmem:[#allocation9 + $0x1c0] sm:$0xff]
      %v701 = vld [vmem:[#allocation9 + $0x1c8] sm:$0xff]
      %v702 = vld [vmem:[#allocation9 + $0x1d0] sm:$0xff]
      %v703 = vld [vmem:[#allocation9 + $0x1d8] sm:$0xff]
      %v704 = vld [vmem:[#allocation9 + $0x1e0] sm:$0xff]
      %v705 = vld [vmem:[#allocation9 + $0x1e8] sm:$0xff]
      %v706 = vld [vmem:[#allocation9 + $0x1f0] sm:$0xff]
      %v707 = vld [vmem:[#allocation9 + $0x1f8] sm:$0xff]
      %v709 = vperm.slane %v640, 0
      %v711 = vmul.f32 %v644, %v709
      %v712 = vmul.f32 %v645, %v709
      %v713 = vmul.f32 %v646, %v709
      %v714 = vmul.f32 %v647, %v709
      %v715 = vmul.f32 %v648, %v709
      %v716 = vmul.f32 %v649, %v709
      %v717 = vmul.f32 %v650, %v709
      %v718 = vmul.f32 %v651, %v709
      %v719 = vmul.f32 %v652, %v709
      %v720 = vmul.f32 %v653, %v709
      %v721 = vmul.f32 %v654, %v709
      %v722 = vmul.f32 %v655, %v709
      %v723 = vmul.f32 %v656, %v709
      %v724 = vmul.f32 %v657, %v709
      %v725 = vmul.f32 %v658, %v709
      %v726 = vmul.f32 %v659, %v709
      %v727 = vmul.f32 %v660, %v709
      %v728 = vmul.f32 %v661, %v709
      %v729 = vmul.f32 %v662, %v709
      %v730 = vmul.f32 %v663, %v709
      %v731 = vmul.f32 %v664, %v709
      %v732 = vmul.f32 %v665, %v709
      %v733 = vmul.f32 %v666, %v709
      %v734 = vmul.f32 %v667, %v709
      %v735 = vmul.f32 %v668, %v709
      %v736 = vmul.f32 %v669, %v709
      %v737 = vmul.f32 %v670, %v709
      %v738 = vmul.f32 %v671, %v709
      %v739 = vmul.f32 %v672, %v709
      %v740 = vmul.f32 %v673, %v709
      %v741 = vmul.f32 %v674, %v709
      %v742 = vmul.f32 %v675, %v709
      %v743 = vmul.f32 %v676, %v709
      %v744 = vmul.f32 %v677, %v709
      %v745 = vmul.f32 %v678, %v709
      %v746 = vmul.f32 %v679, %v709
      %v747 = vmul.f32 %v680, %v709
      %v748 = vmul.f32 %v681, %v709
      %v749 = vmul.f32 %v682, %v709
      %v750 = vmul.f32 %v683, %v709
      %v751 = vmul.f32 %v684, %v709
      %v752 = vmul.f32 %v685, %v709
      %v753 = vmul.f32 %v686, %v709
      %v754 = vmul.f32 %v687, %v709
      %v755 = vmul.f32 %v688, %v709
      %v756 = vmul.f32 %v689, %v709
      %v757 = vmul.f32 %v690, %v709
      %v758 = vmul.f32 %v691, %v709
      %v759 = vmul.f32 %v692, %v709
      %v760 = vmul.f32 %v693, %v709
      %v761 = vmul.f32 %v694, %v709
      %v762 = vmul.f32 %v695, %v709
      %v763 = vmul.f32 %v696, %v709
      %v764 = vmul.f32 %v697, %v709
      %v765 = vmul.f32 %v698, %v709
      %v766 = vmul.f32 %v699, %v709
      %v767 = vmul.f32 %v700, %v709
      %v768 = vmul.f32 %v701, %v709
      %v769 = vmul.f32 %v702, %v709
      %v770 = vmul.f32 %v703, %v709
      %v771 = vmul.f32 %v704, %v709
      %v772 = vmul.f32 %v705, %v709
      %v773 = vmul.f32 %v706, %v709
      %v774 = vmul.f32 %v707, %v709
      %v776 = vperm.slane %v643, 0
      %v778 = vadd.f32 %v711, %v776
      %v779 = vadd.f32 %v712, %v776
      %v780 = vadd.f32 %v713, %v776
      %v781 = vadd.f32 %v714, %v776
      %v782 = vadd.f32 %v715, %v776
      %v783 = vadd.f32 %v716, %v776
      %v784 = vadd.f32 %v717, %v776
      %v785 = vadd.f32 %v718, %v776
      %v786 = vadd.f32 %v719, %v776
      %v787 = vadd.f32 %v720, %v776
      %v788 = vadd.f32 %v721, %v776
      %v789 = vadd.f32 %v722, %v776
      %v790 = vadd.f32 %v723, %v776
      %v791 = vadd.f32 %v724, %v776
      %v792 = vadd.f32 %v725, %v776
      %v793 = vadd.f32 %v726, %v776
      %v794 = vadd.f32 %v727, %v776
      %v795 = vadd.f32 %v728, %v776
      %v796 = vadd.f32 %v729, %v776
      %v797 = vadd.f32 %v730, %v776
      %v798 = vadd.f32 %v731, %v776
      %v799 = vadd.f32 %v732, %v776
      %v800 = vadd.f32 %v733, %v776
      %v801 = vadd.f32 %v734, %v776
      %v802 = vadd.f32 %v735, %v776
      %v803 = vadd.f32 %v736, %v776
      %v804 = vadd.f32 %v737, %v776
      %v805 = vadd.f32 %v738, %v776
      %v806 = vadd.f32 %v739, %v776
      %v807 = vadd.f32 %v740, %v776
      %v808 = vadd.f32 %v741, %v776
      %v809 = vadd.f32 %v742, %v776
      %v810 = vadd.f32 %v743, %v776
      %v811 = vadd.f32 %v744, %v776
      %v812 = vadd.f32 %v745, %v776
      %v813 = vadd.f32 %v746, %v776
      %v814 = vadd.f32 %v747, %v776
      %v815 = vadd.f32 %v748, %v776
      %v816 = vadd.f32 %v749, %v776
      %v817 = vadd.f32 %v750, %v776
      %v818 = vadd.f32 %v751, %v776
      %v819 = vadd.f32 %v752, %v776
      %v820 = vadd.f32 %v753, %v776
      %v821 = vadd.f32 %v754, %v776
      %v822 = vadd.f32 %v755, %v776
      %v823 = vadd.f32 %v756, %v776
      %v824 = vadd.f32 %v757, %v776
      %v825 = vadd.f32 %v758, %v776
      %v826 = vadd.f32 %v759, %v776
      %v827 = vadd.f32 %v760, %v776
      %v828 = vadd.f32 %v761, %v776
      %v829 = vadd.f32 %v762, %v776
      %v830 = vadd.f32 %v763, %v776
      %v831 = vadd.f32 %v764, %v776
      %v832 = vadd.f32 %v765, %v776
      %v833 = vadd.f32 %v766, %v776
      %v834 = vadd.f32 %v767, %v776
      %v835 = vadd.f32 %v768, %v776
      %v836 = vadd.f32 %v769, %v776
      %v837 = vadd.f32 %v770, %v776
      %v838 = vadd.f32 %v771, %v776
      %v839 = vadd.f32 %v772, %v776
      %v840 = vadd.f32 %v773, %v776
      %v841 = vadd.f32 %v774, %v776
      %vm842 = vcmp.ge.f32.partialorder %v778, 0.0
      %vm843 = vcmp.ge.f32.partialorder %v779, 0.0
      %vm844 = vcmp.ge.f32.partialorder %v780, 0.0
      %vm845 = vcmp.ge.f32.partialorder %v781, 0.0
      %vm846 = vcmp.ge.f32.partialorder %v782, 0.0
      %vm847 = vcmp.ge.f32.partialorder %v783, 0.0
      %vm848 = vcmp.ge.f32.partialorder %v784, 0.0
      %vm849 = vcmp.ge.f32.partialorder %v785, 0.0
      %vm850 = vcmp.ge.f32.partialorder %v786, 0.0
      %vm851 = vcmp.ge.f32.partialorder %v787, 0.0
      %vm852 = vcmp.ge.f32.partialorder %v788, 0.0
      %vm853 = vcmp.ge.f32.partialorder %v789, 0.0
      %vm854 = vcmp.ge.f32.partialorder %v790, 0.0
      %vm855 = vcmp.ge.f32.partialorder %v791, 0.0
      %vm856 = vcmp.ge.f32.partialorder %v792, 0.0
      %vm857 = vcmp.ge.f32.partialorder %v793, 0.0
      %vm858 = vcmp.ge.f32.partialorder %v794, 0.0
      %vm859 = vcmp.ge.f32.partialorder %v795, 0.0
      %vm860 = vcmp.ge.f32.partialorder %v796, 0.0
      %vm861 = vcmp.ge.f32.partialorder %v797, 0.0
      %vm862 = vcmp.ge.f32.partialorder %v798, 0.0
      %vm863 = vcmp.ge.f32.partialorder %v799, 0.0
      %vm864 = vcmp.ge.f32.partialorder %v800, 0.0
      %vm865 = vcmp.ge.f32.partialorder %v801, 0.0
      %vm866 = vcmp.ge.f32.partialorder %v802, 0.0
      %vm867 = vcmp.ge.f32.partialorder %v803, 0.0
      %vm868 = vcmp.ge.f32.partialorder %v804, 0.0
      %vm869 = vcmp.ge.f32.partialorder %v805, 0.0
      %vm870 = vcmp.ge.f32.partialorder %v806, 0.0
      %vm871 = vcmp.ge.f32.partialorder %v807, 0.0
      %vm872 = vcmp.ge.f32.partialorder %v808, 0.0
      %vm873 = vcmp.ge.f32.partialorder %v809, 0.0
      %vm874 = vcmp.ge.f32.partialorder %v810, 0.0
      %vm875 = vcmp.ge.f32.partialorder %v811, 0.0
      %vm876 = vcmp.ge.f32.partialorder %v812, 0.0
      %vm877 = vcmp.ge.f32.partialorder %v813, 0.0
      %vm878 = vcmp.ge.f32.partialorder %v814, 0.0
      %vm879 = vcmp.ge.f32.partialorder %v815, 0.0
      %vm880 = vcmp.ge.f32.partialorder %v816, 0.0
      %vm881 = vcmp.ge.f32.partialorder %v817, 0.0
      %vm882 = vcmp.ge.f32.partialorder %v818, 0.0
      %vm883 = vcmp.ge.f32.partialorder %v819, 0.0
      %vm884 = vcmp.ge.f32.partialorder %v820, 0.0
      %vm885 = vcmp.ge.f32.partialorder %v821, 0.0
      %vm886 = vcmp.ge.f32.partialorder %v822, 0.0
      %vm887 = vcmp.ge.f32.partialorder %v823, 0.0
      %vm888 = vcmp.ge.f32.partialorder %v824, 0.0
      %vm889 = vcmp.ge.f32.partialorder %v825, 0.0
      %vm890 = vcmp.ge.f32.partialorder %v826, 0.0
      %vm891 = vcmp.ge.f32.partialorder %v827, 0.0
      %vm892 = vcmp.ge.f32.partialorder %v828, 0.0
      %vm893 = vcmp.ge.f32.partialorder %v829, 0.0
      %vm894 = vcmp.ge.f32.partialorder %v830, 0.0
      %vm895 = vcmp.ge.f32.partialorder %v831, 0.0
      %vm896 = vcmp.ge.f32.partialorder %v832, 0.0
      %vm897 = vcmp.ge.f32.partialorder %v833, 0.0
      %vm898 = vcmp.ge.f32.partialorder %v834, 0.0
      %vm899 = vcmp.ge.f32.partialorder %v835, 0.0
      %vm900 = vcmp.ge.f32.partialorder %v836, 0.0
      %vm901 = vcmp.ge.f32.partialorder %v837, 0.0
      %vm902 = vcmp.ge.f32.partialorder %v838, 0.0
      %vm903 = vcmp.ge.f32.partialorder %v839, 0.0
      %vm904 = vcmp.ge.f32.partialorder %v840, 0.0
      %vm905 = vcmp.ge.f32.partialorder %v841, 0.0
      %v906 = vmul.f32 %v778, 0.1
      %v907 = vmul.f32 %v779, 0.1
      %v908 = vmul.f32 %v780, 0.1
      %v909 = vmul.f32 %v781, 0.1
      %v910 = vmul.f32 %v782, 0.1
      %v911 = vmul.f32 %v783, 0.1
      %v912 = vmul.f32 %v784, 0.1
      %v913 = vmul.f32 %v785, 0.1
      %v914 = vmul.f32 %v786, 0.1
      %v915 = vmul.f32 %v787, 0.1
      %v916 = vmul.f32 %v788, 0.1
      %v917 = vmul.f32 %v789, 0.1
      %v918 = vmul.f32 %v790, 0.1
      %v919 = vmul.f32 %v791, 0.1
      %v920 = vmul.f32 %v792, 0.1
      %v921 = vmul.f32 %v793, 0.1
      %v922 = vmul.f32 %v794, 0.1
      %v923 = vmul.f32 %v795, 0.1
      %v924 = vmul.f32 %v796, 0.1
      %v925 = vmul.f32 %v797, 0.1
      %v926 = vmul.f32 %v798, 0.1
      %v927 = vmul.f32 %v799, 0.1
      %v928 = vmul.f32 %v800, 0.1
      %v929 = vmul.f32 %v801, 0.1
      %v930 = vmul.f32 %v802, 0.1
      %v931 = vmul.f32 %v803, 0.1
      %v932 = vmul.f32 %v804, 0.1
      %v933 = vmul.f32 %v805, 0.1
      %v934 = vmul.f32 %v806, 0.1
      %v935 = vmul.f32 %v807, 0.1
      %v936 = vmul.f32 %v808, 0.1
      %v937 = vmul.f32 %v809, 0.1
      %v938 = vmul.f32 %v810, 0.1
      %v939 = vmul.f32 %v811, 0.1
      %v940 = vmul.f32 %v812, 0.1
      %v941 = vmul.f32 %v813, 0.1
      %v942 = vmul.f32 %v814, 0.1
      %v943 = vmul.f32 %v815, 0.1
      %v944 = vmul.f32 %v816, 0.1
      %v945 = vmul.f32 %v817, 0.1
      %v946 = vmul.f32 %v818, 0.1
      %v947 = vmul.f32 %v819, 0.1
      %v948 = vmul.f32 %v820, 0.1
      %v949 = vmul.f32 %v821, 0.1
      %v950 = vmul.f32 %v822, 0.1
      %v951 = vmul.f32 %v823, 0.1
      %v952 = vmul.f32 %v824, 0.1
      %v953 = vmul.f32 %v825, 0.1
      %v954 = vmul.f32 %v826, 0.1
      %v955 = vmul.f32 %v827, 0.1
      %v956 = vmul.f32 %v828, 0.1
      %v957 = vmul.f32 %v829, 0.1
      %v958 = vmul.f32 %v830, 0.1
      %v959 = vmul.f32 %v831, 0.1
      %v960 = vmul.f32 %v832, 0.1
      %v961 = vmul.f32 %v833, 0.1
      %v962 = vmul.f32 %v834, 0.1
      %v963 = vmul.f32 %v835, 0.1
      %v964 = vmul.f32 %v836, 0.1
      %v965 = vmul.f32 %v837, 0.1
      %v966 = vmul.f32 %v838, 0.1
      %v967 = vmul.f32 %v839, 0.1
      %v968 = vmul.f32 %v840, 0.1
      %v969 = vmul.f32 %v841, 0.1
      %v970 = vsel %vm842, %v778, %v906
      %v971 = vsel %vm843, %v779, %v907
      %v972 = vsel %vm844, %v780, %v908
      %v973 = vsel %vm845, %v781, %v909
      %v974 = vsel %vm846, %v782, %v910
      %v975 = vsel %vm847, %v783, %v911
      %v976 = vsel %vm848, %v784, %v912
      %v977 = vsel %vm849, %v785, %v913
      %v978 = vsel %vm850, %v786, %v914
      %v979 = vsel %vm851, %v787, %v915
      %v980 = vsel %vm852, %v788, %v916
      %v981 = vsel %vm853, %v789, %v917
      %v982 = vsel %vm854, %v790, %v918
      %v983 = vsel %vm855, %v791, %v919
      %v984 = vsel %vm856, %v792, %v920
      %v985 = vsel %vm857, %v793, %v921
      %v986 = vsel %vm858, %v794, %v922
      %v987 = vsel %vm859, %v795, %v923
      %v988 = vsel %vm860, %v796, %v924
      %v989 = vsel %vm861, %v797, %v925
      %v990 = vsel %vm862, %v798, %v926
      %v991 = vsel %vm863, %v799, %v927
      %v992 = vsel %vm864, %v800, %v928
      %v993 = vsel %vm865, %v801, %v929
      %v994 = vsel %vm866, %v802, %v930
      %v995 = vsel %vm867, %v803, %v931
      %v996 = vsel %vm868, %v804, %v932
      %v997 = vsel %vm869, %v805, %v933
      %v998 = vsel %vm870, %v806, %v934
      %v999 = vsel %vm871, %v807, %v935
      %v1000 = vsel %vm872, %v808, %v936
      %v1001 = vsel %vm873, %v809, %v937
      %v1002 = vsel %vm874, %v810, %v938
      %v1003 = vsel %vm875, %v811, %v939
      %v1004 = vsel %vm876, %v812, %v940
      %v1005 = vsel %vm877, %v813, %v941
      %v1006 = vsel %vm878, %v814, %v942
      %v1007 = vsel %vm879, %v815, %v943
      %v1008 = vsel %vm880, %v816, %v944
      %v1009 = vsel %vm881, %v817, %v945
      %v1010 = vsel %vm882, %v818, %v946
      %v1011 = vsel %vm883, %v819, %v947
      %v1012 = vsel %vm884, %v820, %v948
      %v1013 = vsel %vm885, %v821, %v949
      %v1014 = vsel %vm886, %v822, %v950
      %v1015 = vsel %vm887, %v823, %v951
      %v1016 = vsel %vm888, %v824, %v952
      %v1017 = vsel %vm889, %v825, %v953
      %v1018 = vsel %vm890, %v826, %v954
      %v1019 = vsel %vm891, %v827, %v955
      %v1020 = vsel %vm892, %v828, %v956
      %v1021 = vsel %vm893, %v829, %v957
      %v1022 = vsel %vm894, %v830, %v958
      %v1023 = vsel %vm895, %v831, %v959
      %v1024 = vsel %vm896, %v832, %v960
      %v1025 = vsel %vm897, %v833, %v961
      %v1026 = vsel %vm898, %v834, %v962
      %v1027 = vsel %vm899, %v835, %v963
      %v1028 = vsel %vm900, %v836, %v964
      %v1029 = vsel %vm901, %v837, %v965
      %v1030 = vsel %vm902, %v838, %v966
      %v1031 = vsel %vm903, %v839, %v967
      %v1032 = vsel %vm904, %v840, %v968
      %v1033 = vsel %vm905, %v841, %v969
      %1034 = vst [vmem:[#allocation9] sm:$0xff] %v970
      %1035 = vst [vmem:[#allocation9 + $0x8] sm:$0xff] %v971
      %1036 = vst [vmem:[#allocation9 + $0x10] sm:$0xff] %v972
      %1037 = vst [vmem:[#allocation9 + $0x18] sm:$0xff] %v973
      %1038 = vst [vmem:[#allocation9 + $0x20] sm:$0xff] %v974
      %1039 = vst [vmem:[#allocation9 + $0x28] sm:$0xff] %v975
      %1040 = vst [vmem:[#allocation9 + $0x30] sm:$0xff] %v976
      %1041 = vst [vmem:[#allocation9 + $0x38] sm:$0xff] %v977
      %1042 = vst [vmem:[#allocation9 + $0x40] sm:$0xff] %v978
      %1043 = vst [vmem:[#allocation9 + $0x48] sm:$0xff] %v979
      %1044 = vst [vmem:[#allocation9 + $0x50] sm:$0xff] %v980
      %1045 = vst [vmem:[#allocation9 + $0x58] sm:$0xff] %v981
      %1046 = vst [vmem:[#allocation9 + $0x60] sm:$0xff] %v982
      %1047 = vst [vmem:[#allocation9 + $0x68] sm:$0xff] %v983
      %1048 = vst [vmem:[#allocation9 + $0x70] sm:$0xff] %v984
      %1049 = vst [vmem:[#allocation9 + $0x78] sm:$0xff] %v985
      %1050 = vst [vmem:[#allocation9 + $0x80] sm:$0xff] %v986
      %1051 = vst [vmem:[#allocation9 + $0x88] sm:$0xff] %v987
      %1052 = vst [vmem:[#allocation9 + $0x90] sm:$0xff] %v988
      %1053 = vst [vmem:[#allocation9 + $0x98] sm:$0xff] %v989
      %1054 = vst [vmem:[#allocation9 + $0xa0] sm:$0xff] %v990
      %1055 = vst [vmem:[#allocation9 + $0xa8] sm:$0xff] %v991
      %1056 = vst [vmem:[#allocation9 + $0xb0] sm:$0xff] %v992
      %1057 = vst [vmem:[#allocation9 + $0xb8] sm:$0xff] %v993
      %1058 = vst [vmem:[#allocation9 + $0xc0] sm:$0xff] %v994
      %1059 = vst [vmem:[#allocation9 + $0xc8] sm:$0xff] %v995
      %1060 = vst [vmem:[#allocation9 + $0xd0] sm:$0xff] %v996
      %1061 = vst [vmem:[#allocation9 + $0xd8] sm:$0xff] %v997
      %1062 = vst [vmem:[#allocation9 + $0xe0] sm:$0xff] %v998
      %1063 = vst [vmem:[#allocation9 + $0xe8] sm:$0xff] %v999
      %1064 = vst [vmem:[#allocation9 + $0xf0] sm:$0xff] %v1000
      %1065 = vst [vmem:[#allocation9 + $0xf8] sm:$0xff] %v1001
      %1066 = vst [vmem:[#allocation9 + $0x100] sm:$0xff] %v1002
      %1067 = vst [vmem:[#allocation9 + $0x108] sm:$0xff] %v1003
      %1068 = vst [vmem:[#allocation9 + $0x110] sm:$0xff] %v1004
      %1069 = vst [vmem:[#allocation9 + $0x118] sm:$0xff] %v1005
      %1070 = vst [vmem:[#allocation9 + $0x120] sm:$0xff] %v1006
      %1071 = vst [vmem:[#allocation9 + $0x128] sm:$0xff] %v1007
      %1072 = vst [vmem:[#allocation9 + $0x130] sm:$0xff] %v1008
      %1073 = vst [vmem:[#allocation9 + $0x138] sm:$0xff] %v1009
      %1074 = vst [vmem:[#allocation9 + $0x140] sm:$0xff] %v1010
      %1075 = vst [vmem:[#allocation9 + $0x148] sm:$0xff] %v1011
      %1076 = vst [vmem:[#allocation9 + $0x150] sm:$0xff] %v1012
      %1077 = vst [vmem:[#allocation9 + $0x158] sm:$0xff] %v1013
      %1078 = vst [vmem:[#allocation9 + $0x160] sm:$0xff] %v1014
      %1079 = vst [vmem:[#allocation9 + $0x168] sm:$0xff] %v1015
      %1080 = vst [vmem:[#allocation9 + $0x170] sm:$0xff] %v1016
      %1081 = vst [vmem:[#allocation9 + $0x178] sm:$0xff] %v1017
      %1082 = vst [vmem:[#allocation9 + $0x180] sm:$0xff] %v1018
      %1083 = vst [vmem:[#allocation9 + $0x188] sm:$0xff] %v1019
      %1084 = vst [vmem:[#allocation9 + $0x190] sm:$0xff] %v1020
      %1085 = vst [vmem:[#allocation9 + $0x198] sm:$0xff] %v1021
      %1086 = vst [vmem:[#allocation9 + $0x1a0] sm:$0xff] %v1022
      %1087 = vst [vmem:[#allocation9 + $0x1a8] sm:$0xff] %v1023
      %1088 = vst [vmem:[#allocation9 + $0x1b0] sm:$0xff] %v1024
      %1089 = vst [vmem:[#allocation9 + $0x1b8] sm:$0xff] %v1025
      %1090 = vst [vmem:[#allocation9 + $0x1c0] sm:$0xff] %v1026
      %1091 = vst [vmem:[#allocation9 + $0x1c8] sm:$0xff] %v1027
      %1092 = vst [vmem:[#allocation9 + $0x1d0] sm:$0xff] %v1028
      %1093 = vst [vmem:[#allocation9 + $0x1d8] sm:$0xff] %v1029
      %1094 = vst [vmem:[#allocation9 + $0x1e0] sm:$0xff] %v1030
      %1095 = vst [vmem:[#allocation9 + $0x1e8] sm:$0xff] %v1031
      %1096 = vst [vmem:[#allocation9 + $0x1f0] sm:$0xff] %v1032
      %1097 = vst [vmem:[#allocation9 + $0x1f8] sm:$0xff] %v1033
    $region33: #{tpu_custom_call.1} parent=1 // pred_fallthru
      _
    // Predicated region
    $region34: #{tpu_custom_call.1} parent=1 // pred_check
      _
    $region35: #{tpu_custom_call.1} parent=1 // pred_check_branch
      %1099 = sbr.rel (0) target = $region37
    $region36: #{tpu_custom_call.1} parent=1 // pred_region
      %1101 = vsyncadd [#allocation6], 0
      %s1102 = sshll.u32 [#allocation9], 4
      %s1103 = int_to_ptr.vmem [resolvable:$true] %s1102
      %s1104 = sshll.u32 %s4, 4
      %s1105 = int_to_ptr.hbm [resolvable:$true] %s1104
      %1110 = dma.vmem_to_hbm [thread:$0]  %s1103, 8192, %s1105, [#allocation6], 128, 128, 8
    $region37: #{tpu_custom_call.1} parent=1 // pred_fallthru
      _
    // Predicated region
    $region38: #{tpu_custom_call.1} parent=1 // pred_check
      _
    $region39: #{tpu_custom_call.1} parent=1 // pred_check_branch
      %1112 = sbr.rel (0) target = $region41
    $region40: #{tpu_custom_call.1} parent=1 // pred_region
      %1114 = dma.done [#allocation6], 8192
    $region41: #{tpu_custom_call.1} parent=1 // pred_fallthru
      _
    %1115 = vsyncpa [#allocation5], 1
    %1116 = vsyncpa [#allocation8], 1
    %1117 = vsyncpa [#allocation6], 1

</llo_original>
